<compile_context>
chip_gen: v7x
topology: tpu7x:2x2x1
jax: 0.10.0
libtpu: 0.0.40
codegen_flags: <defaults>
</compile_context>

<pallas_src>
import jax
import jax.numpy as jnp
from jax import lax
from jax.experimental import pallas as pl
from jax.experimental.pallas import tpu as pltpu

B = 2                              # batch
C_IN, C_OUT = 3, 6
K = 5                              # conv kernel size
H = W = 14                         # input spatial
H_CONV = H - K + 1                 # 10
H_POOL = H_CONV // 2               # 5
IN_FLAT = C_IN * H * W             # 588
FLAT = C_OUT * H_POOL * H_POOL     # 150  (fc1 input features)
POOL_BLK = 256                     # lane-dense padding of the 150-wide block
FC_PAD = 128                       # lane-dense padding for fc widths
ROWS = 4 * B                       # 8 = 4 pool offsets x batch (full sublane granule)


# ---------------------------------------------------------------------------
# Fused kernel: conv (one bf16 matmul) + bias + ReLU + 2x2 max-pool (sublane
# roll + max) + fc1/fc2/fc3.  Everything lane/sublane-dense, stays in VMEM.
# ---------------------------------------------------------------------------
def fused_cnn_kernel(x4_ref, t_ref, bc_ref, w1_ref, b1_ref, w2_ref, b2_ref,
                     w3_ref, b3_ref, o_ref):
    # Conv for all 4 pool offsets at once: bf16 [8,588] x bf16 [588,256],
    # f32 accumulation.  Row q*B + b holds conv(x)[b, :, 2i+di, 2j+dj]
    # flattened over (c_out, i, j), with q = 2*di + dj.
    y4 = jnp.dot(x4_ref[...], t_ref[...], preferred_element_type=jnp.float32)
    y4 = jnp.maximum(y4 + bc_ref[...], 0.0)

    # 2x2 max-pool == max over the 4 sublane groups {b, b+B, b+2B, b+3B}.
    # Three sublane rotations bring every group member onto rows [0, B); the
    # offset set {B, 2B, 3B} is symmetric mod 4B so roll direction is
    # irrelevant.  Rows >= B hold junk and are dropped in the wrapper.
    p = jnp.maximum(
        jnp.maximum(y4, pltpu.roll(y4, shift=B, axis=0)),
        jnp.maximum(pltpu.roll(y4, shift=2 * B, axis=0),
                    pltpu.roll(y4, shift=3 * B, axis=0)))
    # p[:B, :150] is the pooled activation in PyTorch flatten order (c,i,j);
    # columns 150..255 are exactly zero and meet zero rows of w1.

    h1 = jnp.maximum(
        jnp.dot(p, w1_ref[...], preferred_element_type=jnp.float32) + b1_ref[...], 0.0)
    h2 = jnp.maximum(
        jnp.dot(h1, w2_ref[...], preferred_element_type=jnp.float32) + b2_ref[...], 0.0)
    o = jnp.dot(h2, w3_ref[...], preferred_element_type=jnp.float32) + b3_ref[...]
    o_ref[...] = o.astype(o_ref.dtype)


# ---------------------------------------------------------------------------
# One-time (init) weight preparation: Toeplitz conv weight + padded fc weights.
# ---------------------------------------------------------------------------
def _pad_to(a, shape):
    return jnp.pad(a, [(0, s - d) for s, d in zip(shape, a.shape)])


def _build_conv_toeplitz(wc):
    """T[(ci,y,x), (co,i,j)] = wc[co, ci, y-2i, x-2j]  (0 outside the 5x5 tap).

    With X shifted by the pool offset (di,dj), (X_shift @ T)[b, (co,i,j)] =
    conv(x)[b, co, 2i+di, 2j+dj], so the 2x2 max-pool becomes a max over the
    4 shifted rows and the result is already in PyTorch's flatten order.
    """
    y = jnp.arange(H)[:, None, None]
    i = jnp.arange(H_POOL)[None, :, None]
    k = jnp.arange(K)[None, None, :]
    A = (y == 2 * i + k).astype(jnp.float32)               # [14, 5, 5]
    T = jnp.einsum('ocKL,yiK,xjL->cyxoij', wc, A, A)       # [3,14,14,6,5,5]
    T = T.reshape(IN_FLAT, FLAT)                           # [588, 150]
    return jnp.pad(T, ((0, 0), (0, POOL_BLK - FLAT)))      # [588, 256]


def prepare_params(params):
    """Pre-transpose / pre-pad all weights (called once, outside the hot path)."""
    wc, bc, w1, b1, w2, b2, w3, b3 = params

    t = _build_conv_toeplitz(wc).astype(jnp.bfloat16)                   # [588,256] bf16
    bc_row = jnp.pad(jnp.repeat(bc, H_POOL * H_POOL),
                     (0, POOL_BLK - FLAT)).reshape(1, POOL_BLK)          # [1,256] f32

    w1p = _pad_to(w1.T, (POOL_BLK, FC_PAD))                              # [256,128]
    b1p = _pad_to(b1.reshape(1, -1), (1, FC_PAD))
    w2p = _pad_to(w2.T, (FC_PAD, FC_PAD))                                # [128,128]
    b2p = _pad_to(b2.reshape(1, -1), (1, FC_PAD))
    w3p = _pad_to(w3.T, (FC_PAD, FC_PAD))                                # [128,128]
    b3p = _pad_to(b3.reshape(1, -1), (1, FC_PAD))
    return (t, bc_row, w1p, b1p, w2p, b2p, w3p, b3p)


# ---------------------------------------------------------------------------
# Forward pass: build the 4-shift LHS, one pallas_call, one slice.
# ---------------------------------------------------------------------------
def simple_cnn_forward(x, prepared):
    t, bc_row, w1p, b1p, w2p, b2p, w3p, b3p = prepared

    # LHS = 4 shifted copies of x (one per 2x2-pool offset), row = q*B + b.
    shifts = []
    for di in (0, 1):
        for dj in (0, 1):
            xs = jnp.pad(x[:, :, di:, dj:], ((0, 0), (0, 0), (0, di), (0, dj)))
            shifts.append(xs.reshape(B, IN_FLAT))
    x4 = jnp.concatenate(shifts, axis=0).astype(jnp.bfloat16)           # [8, 588] bf16

    flops = 2 * ROWS * (IN_FLAT * POOL_BLK + POOL_BLK * FC_PAD + 2 * FC_PAD * FC_PAD)
    bytes_accessed = (2 * (ROWS * IN_FLAT + IN_FLAT * POOL_BLK)          # bf16 inputs
                      + 4 * (POOL_BLK + POOL_BLK * FC_PAD + 2 * FC_PAD * FC_PAD
                             + 3 * FC_PAD + ROWS * FC_PAD))

    out_pad = pl.pallas_call(
        fused_cnn_kernel,
        out_shape=jax.ShapeDtypeStruct((ROWS, FC_PAD), jnp.float32),
        in_specs=[pl.BlockSpec(memory_space=pltpu.MemorySpace.VMEM)] * 9,
        out_specs=pl.BlockSpec(memory_space=pltpu.MemorySpace.VMEM),
        compiler_params=pltpu.CompilerParams(vmem_limit_bytes=8 * 1024 * 1024),
        cost_estimate=pl.CostEstimate(flops=flops, transcendentals=0,
                                      bytes_accessed=bytes_accessed),
    )(x4, t, bc_row, w1p, b1p, w2p, b2p, w3p, b3p)

    return out_pad[:B, :10]


# ---------------------------------------------------------------------------
# Pure-JAX reference matching PyTorch semantics (for validation).
# ---------------------------------------------------------------------------
def reference_forward(x, params):
    wc, bc, w1, b1, w2, b2, w3, b3 = params
    y = lax.conv_general_dilated(
        x, wc, window_strides=(1, 1), padding='VALID',
        dimension_numbers=('NCHW', 'OIHW', 'NCHW'))
    y = y + bc.reshape(1, C_OUT, 1, 1)
    y = jnp.maximum(y, 0.0)
    y = lax.reduce_window(y, -jnp.inf, lax.max, (1, 1, 2, 2), (1, 1, 2, 2), 'VALID')
    y = y.reshape(B, FLAT)
    y = jnp.maximum(y @ w1.T + b1, 0.0)
    y = jnp.maximum(y @ w2.T + b2, 0.0)
    return y @ w3.T + b3


def init_params(key):
    ks = jax.random.split(key, 8)
    wc = 0.1 * jax.random.normal(ks[0], (C_OUT, C_IN, K, K), jnp.float32)   # conv1.weight
    bc = 0.1 * jax.random.normal(ks[1], (C_OUT,), jnp.float32)              # conv1.bias
    w1 = 0.1 * jax.random.normal(ks[2], (120, FLAT), jnp.float32)           # fc1.weight
    b1 = 0.1 * jax.random.normal(ks[3], (120,), jnp.float32)                # fc1.bias
    w2 = 0.1 * jax.random.normal(ks[4], (84, 120), jnp.float32)             # fc2.weight
    b2 = 0.1 * jax.random.normal(ks[5], (84,), jnp.float32)                 # fc2.bias
    w3 = 0.1 * jax.random.normal(ks[6], (10, 84), jnp.float32)              # fc3.weight
    b3 = 0.1 * jax.random.normal(ks[7], (10,), jnp.float32)                 # fc3.bias
    return (wc, bc, w1, b1, w2, b2, w3, b3)


if __name__ == "__main__":
    key = jax.random.PRNGKey(0)
    pkey, xkey = jax.random.split(key)
    params = init_params(pkey)
    x = jax.random.normal(xkey, (B, C_IN, H, W), jnp.float32)

    prepared = prepare_params(params)          # one-time weight prep (off the hot path)

    fwd = jax.jit(simple_cnn_forward)
    out = jax.block_until_ready(fwd(x, prepared))
    assert out.shape == (B, 10), out.shape

    ref = reference_forward(x, params)
    # Tolerance relaxed vs. pure-f32: conv operands (T, x) are bf16; accumulation
    # and all fc weights stay f32.
    assert jnp.allclose(out, ref, atol=2e-2, rtol=2e-2), \
        f"max abs diff {jnp.max(jnp.abs(out - ref))}"

    print("KERNEL_OK")
</pallas_src>

<mosaic_0001>
module attributes {stable_mosaic.version = 11 : i64} {
  func.func @fused_cnn_kernel(%arg0: memref<8x588xbf16, #tpu.memory_space<vmem>>, %arg1: memref<588x256xbf16, #tpu.memory_space<vmem>>, %arg2: memref<1x256xf32, #tpu.memory_space<vmem>>, %arg3: memref<256x128xf32, #tpu.memory_space<vmem>>, %arg4: memref<1x128xf32, #tpu.memory_space<vmem>>, %arg5: memref<128x128xf32, #tpu.memory_space<vmem>>, %arg6: memref<1x128xf32, #tpu.memory_space<vmem>>, %arg7: memref<128x128xf32, #tpu.memory_space<vmem>>, %arg8: memref<1x128xf32, #tpu.memory_space<vmem>>, %arg9: memref<8x128xf32, #tpu.memory_space<vmem>>) attributes {dimension_semantics = [], scalar_prefetch = 0 : i64, scratch_operands = 0 : i64, tpu.core_type = #tpu.core_type<tc>} {
    %c0 = arith.constant 0 : index
    %c0_0 = arith.constant 0 : index
    %0 = vector.load %arg0[%c0, %c0_0] : memref<8x588xbf16, #tpu.memory_space<vmem>>, vector<8x588xbf16>
    %c0_1 = arith.constant 0 : index
    %c0_2 = arith.constant 0 : index
    %1 = vector.load %arg1[%c0_1, %c0_2] : memref<588x256xbf16, #tpu.memory_space<vmem>>, vector<588x256xbf16>
    %cst = arith.constant dense<0.000000e+00> : vector<8x256xf32>
    %2 = tpu.matmul %0, %1, %cst {dimension_numbers = #tpu.dot_dimension_numbers<[1], [0], [0], [1], [0, 0, 1, 1], [], []>} : vector<8x588xbf16>, vector<588x256xbf16>, vector<8x256xf32> -> vector<8x256xf32>
    %c0_3 = arith.constant 0 : index
    %c0_4 = arith.constant 0 : index
    %3 = vector.load %arg2[%c0_3, %c0_4] : memref<1x256xf32, #tpu.memory_space<vmem>>, vector<1x256xf32>
    %4 = vector.broadcast %3 : vector<1x256xf32> to vector<8x256xf32>
    %5 = arith.addf %2, %4 : vector<8x256xf32>
    %cst_5 = arith.constant 0.000000e+00 : f32
    %6 = vector.broadcast %cst_5 : f32 to vector<8x256xf32>
    %7 = arith.maximumf %5, %6 : vector<8x256xf32>
    %c2_i32 = arith.constant 2 : i32
    %8 = tpu.dynamic_rotate %7 by %c2_i32 dim 0 : vector<8x256xf32>, i32 -> vector<8x256xf32>
    %9 = arith.maximumf %7, %8 : vector<8x256xf32>
    %c4_i32 = arith.constant 4 : i32
    %10 = tpu.dynamic_rotate %7 by %c4_i32 dim 0 : vector<8x256xf32>, i32 -> vector<8x256xf32>
    %c6_i32 = arith.constant 6 : i32
    %11 = tpu.dynamic_rotate %7 by %c6_i32 dim 0 : vector<8x256xf32>, i32 -> vector<8x256xf32>
    %12 = arith.maximumf %10, %11 : vector<8x256xf32>
    %13 = arith.maximumf %9, %12 : vector<8x256xf32>
    %c0_6 = arith.constant 0 : index
    %c0_7 = arith.constant 0 : index
    %14 = vector.load %arg3[%c0_6, %c0_7] : memref<256x128xf32, #tpu.memory_space<vmem>>, vector<256x128xf32>
    %cst_8 = arith.constant dense<0.000000e+00> : vector<8x128xf32>
    %15 = tpu.matmul %13, %14, %cst_8 {dimension_numbers = #tpu.dot_dimension_numbers<[1], [0], [0], [1], [0, 0, 1, 1], [], []>} : vector<8x256xf32>, vector<256x128xf32>, vector<8x128xf32> -> vector<8x128xf32>
    %c0_9 = arith.constant 0 : index
    %c0_10 = arith.constant 0 : index
    %16 = vector.load %arg4[%c0_9, %c0_10] : memref<1x128xf32, #tpu.memory_space<vmem>>, vector<1x128xf32>
    %17 = vector.broadcast %16 : vector<1x128xf32> to vector<8x128xf32>
    %18 = arith.addf %15, %17 : vector<8x128xf32>
    %cst_11 = arith.constant 0.000000e+00 : f32
    %19 = vector.broadcast %cst_11 : f32 to vector<8x128xf32>
    %20 = arith.maximumf %18, %19 : vector<8x128xf32>
    %c0_12 = arith.constant 0 : index
    %c0_13 = arith.constant 0 : index
    %21 = vector.load %arg5[%c0_12, %c0_13] : memref<128x128xf32, #tpu.memory_space<vmem>>, vector<128x128xf32>
    %cst_14 = arith.constant dense<0.000000e+00> : vector<8x128xf32>
    %22 = tpu.matmul %20, %21, %cst_14 {dimension_numbers = #tpu.dot_dimension_numbers<[1], [0], [0], [1], [0, 0, 1, 1], [], []>} : vector<8x128xf32>, vector<128x128xf32>, vector<8x128xf32> -> vector<8x128xf32>
    %c0_15 = arith.constant 0 : index
    %c0_16 = arith.constant 0 : index
    %23 = vector.load %arg6[%c0_15, %c0_16] : memref<1x128xf32, #tpu.memory_space<vmem>>, vector<1x128xf32>
    %24 = vector.broadcast %23 : vector<1x128xf32> to vector<8x128xf32>
    %25 = arith.addf %22, %24 : vector<8x128xf32>
    %cst_17 = arith.constant 0.000000e+00 : f32
    %26 = vector.broadcast %cst_17 : f32 to vector<8x128xf32>
    %27 = arith.maximumf %25, %26 : vector<8x128xf32>
    %c0_18 = arith.constant 0 : index
    %c0_19 = arith.constant 0 : index
    %28 = vector.load %arg7[%c0_18, %c0_19] : memref<128x128xf32, #tpu.memory_space<vmem>>, vector<128x128xf32>
    %cst_20 = arith.constant dense<0.000000e+00> : vector<8x128xf32>
    %29 = tpu.matmul %27, %28, %cst_20 {dimension_numbers = #tpu.dot_dimension_numbers<[1], [0], [0], [1], [0, 0, 1, 1], [], []>} : vector<8x128xf32>, vector<128x128xf32>, vector<8x128xf32> -> vector<8x128xf32>
    %c0_21 = arith.constant 0 : index
    %c0_22 = arith.constant 0 : index
    %30 = vector.load %arg8[%c0_21, %c0_22] : memref<1x128xf32, #tpu.memory_space<vmem>>, vector<1x128xf32>
    %31 = vector.broadcast %30 : vector<1x128xf32> to vector<8x128xf32>
    %32 = arith.addf %29, %31 : vector<8x128xf32>
    %c0_23 = arith.constant 0 : index
    %c0_24 = arith.constant 0 : index
    %33 = vector.load %arg9[%c0_23, %c0_24] : memref<8x128xf32, #tpu.memory_space<vmem>>, vector<8x128xf32>
    tpu.vector_store %arg9[%c0_23, %c0_24], %32 {strides = array<i32>} : memref<8x128xf32, #tpu.memory_space<vmem>>, vector<8x128xf32>,
    return
  }
}

</mosaic_0001>

<llo_original>
// kernel: simple_cnn_forward.1
$region0: #{simple_cnn_forward.1}
  #allocation0 [shape = 'u32[]', space=smem, size = 0x4, offset = 0x4, fixed_abs, tag = 'smem constant byte address 0x4 - core index']
  #allocation1 [shape = 'u32[144,128]{1,0:T(1,128)}', space=vmem, size = 0x12000, scoped, tag = 'internal scratch']
  %s0 = inlined_call_operand.vmem [shape: bf16[8,588], index: 0, kind: input, shape index: {}]
  %s1 = inlined_call_operand.vmem [shape: bf16[588,256], index: 1, kind: input, shape index: {}]
  %s2 = inlined_call_operand.vmem [shape: f32[1,256], index: 2, kind: input, shape index: {}]
  %s3 = inlined_call_operand.vmem [shape: f32[256,128], index: 3, kind: input, shape index: {}]
  %s4 = inlined_call_operand.vmem [shape: f32[1,128], index: 4, kind: input, shape index: {}]
  %s5 = inlined_call_operand.vmem [shape: f32[128,128], index: 5, kind: input, shape index: {}]
  %s6 = inlined_call_operand.vmem [shape: f32[1,128], index: 6, kind: input, shape index: {}]
  %s7 = inlined_call_operand.vmem [shape: f32[128,128], index: 7, kind: input, shape index: {}]
  %s8 = inlined_call_operand.vmem [shape: f32[1,128], index: 8, kind: input, shape index: {}]
  %s9 = inlined_call_operand.vmem [shape: f32[8,128], index: 9, kind: output, shape index: {}]
  %s10 = sld [smem:[#allocation0]]
  $region46: #{simple_cnn_forward.1} parent=0
    _
  %s12 = ssub.s32 1, %s10
  %s13 = scalar_select 0, %s12, %s10
  // Predicated region
  $region2: #{simple_cnn_forward.1} parent=0 // pred_check
    _
  $region3: #{simple_cnn_forward.1} parent=0 // pred_check_branch
    %15 = sbr.rel (0) target = $region5
  $region4: #{simple_cnn_forward.1} parent=0 // pred_region
    _
  $region5: #{simple_cnn_forward.1} parent=0 // pred_fallthru
    _
  // Predicated region
  $region6: #{simple_cnn_forward.1} parent=0 // pred_check
    _
  $region7: #{simple_cnn_forward.1} parent=0 // pred_check_branch
    %17 = sbr.rel (0) target = $region9
  $region8: #{simple_cnn_forward.1} parent=0 // pred_region
    _
  $region9: #{simple_cnn_forward.1} parent=0 // pred_fallthru
    _
  // Predicated region
  $region10: #{simple_cnn_forward.1} parent=0 // pred_check
    _
  $region11: #{simple_cnn_forward.1} parent=0 // pred_check_branch
    %19 = sbr.rel (0) target = $region13
  $region12: #{simple_cnn_forward.1} parent=0 // pred_region
    _
  $region13: #{simple_cnn_forward.1} parent=0 // pred_fallthru
    _
  // Predicated region
  $region14: #{simple_cnn_forward.1} parent=0 // pred_check
    _
  $region15: #{simple_cnn_forward.1} parent=0 // pred_check_branch
    %21 = sbr.rel (0) target = $region17
  $region16: #{simple_cnn_forward.1} parent=0 // pred_region
    _
  $region17: #{simple_cnn_forward.1} parent=0 // pred_fallthru
    _
  // Predicated region
  $region18: #{simple_cnn_forward.1} parent=0 // pred_check
    _
  $region19: #{simple_cnn_forward.1} parent=0 // pred_check_branch
    %23 = sbr.rel (0) target = $region21
  $region20: #{simple_cnn_forward.1} parent=0 // pred_region
    _
  $region21: #{simple_cnn_forward.1} parent=0 // pred_fallthru
    _
  // Predicated region
  $region22: #{simple_cnn_forward.1} parent=0 // pred_check
    _
  $region23: #{simple_cnn_forward.1} parent=0 // pred_check_branch
    %25 = sbr.rel (0) target = $region25
  $region24: #{simple_cnn_forward.1} parent=0 // pred_region
    _
  $region25: #{simple_cnn_forward.1} parent=0 // pred_fallthru
    _
  // Predicated region
  $region26: #{simple_cnn_forward.1} parent=0 // pred_check
    _
  $region27: #{simple_cnn_forward.1} parent=0 // pred_check_branch
    %27 = sbr.rel (0) target = $region29
  $region28: #{simple_cnn_forward.1} parent=0 // pred_region
    _
  $region29: #{simple_cnn_forward.1} parent=0 // pred_fallthru
    _
  // Predicated region
  $region30: #{simple_cnn_forward.1} parent=0 // pred_check
    _
  $region31: #{simple_cnn_forward.1} parent=0 // pred_check_branch
    %29 = sbr.rel (0) target = $region33
  $region32: #{simple_cnn_forward.1} parent=0 // pred_region
    _
  $region33: #{simple_cnn_forward.1} parent=0 // pred_fallthru
    _
  // Predicated region
  $region34: #{simple_cnn_forward.1} parent=0 // pred_check
    _
  $region35: #{simple_cnn_forward.1} parent=0 // pred_check_branch
    %31 = sbr.rel (0) target = $region37
  $region36: #{simple_cnn_forward.1} parent=0 // pred_region
    _
  $region37: #{simple_cnn_forward.1} parent=0 // pred_fallthru
    _
  %v33 = vld [vmem:[%s0] sm:$0xff]
  %v34 = vld [vmem:[%s0 + $0x8] sm:$0xff]
  %v35 = vld [vmem:[%s0 + $0x10] sm:$0xf]
  %v36 = vld [vmem:[%s1] sm:$0xff]
  %v37 = vld [vmem:[%s1 + $0x8] sm:$0xff]
  %v38 = vld [vmem:[%s1 + $0x10] sm:$0xff]
  %v39 = vld [vmem:[%s1 + $0x18] sm:$0xff]
  %v40 = vld [vmem:[%s1 + $0x20] sm:$0xff]
  %v41 = vld [vmem:[%s1 + $0x28] sm:$0xff]
  %v42 = vld [vmem:[%s1 + $0x30] sm:$0xff]
  %v43 = vld [vmem:[%s1 + $0x38] sm:$0xff]
  %v44 = vld [vmem:[%s1 + $0x40] sm:$0xff]
  %v45 = vld [vmem:[%s1 + $0x48] sm:$0xff]
  %v46 = vld [vmem:[%s1 + $0x50] sm:$0xff]
  %v47 = vld [vmem:[%s1 + $0x58] sm:$0xff]
  %v48 = vld [vmem:[%s1 + $0x60] sm:$0xff]
  %v49 = vld [vmem:[%s1 + $0x68] sm:$0xff]
  %v50 = vld [vmem:[%s1 + $0x70] sm:$0xff]
  %v51 = vld [vmem:[%s1 + $0x78] sm:$0xff]
  %v52 = vld [vmem:[%s1 + $0x80] sm:$0xff]
  %v53 = vld [vmem:[%s1 + $0x88] sm:$0xff]
  %v54 = vld [vmem:[%s1 + $0x90] sm:$0xff]
  %v55 = vld [vmem:[%s1 + $0x98] sm:$0xff]
  %v56 = vld [vmem:[%s1 + $0xa0] sm:$0xff]
  %v57 = vld [vmem:[%s1 + $0xa8] sm:$0xff]
  %v58 = vld [vmem:[%s1 + $0xb0] sm:$0xff]
  %v59 = vld [vmem:[%s1 + $0xb8] sm:$0xff]
  %v60 = vld [vmem:[%s1 + $0xc0] sm:$0xff]
  %v61 = vld [vmem:[%s1 + $0xc8] sm:$0xff]
  %v62 = vld [vmem:[%s1 + $0xd0] sm:$0xff]
  %v63 = vld [vmem:[%s1 + $0xd8] sm:$0xff]
  %v64 = vld [vmem:[%s1 + $0xe0] sm:$0xff]
  %v65 = vld [vmem:[%s1 + $0xe8] sm:$0xff]
  %v66 = vld [vmem:[%s1 + $0xf0] sm:$0xff]
  %v67 = vld [vmem:[%s1 + $0xf8] sm:$0xff]
  %v68 = vld [vmem:[%s1 + $0x100] sm:$0xff]
  %v69 = vld [vmem:[%s1 + $0x108] sm:$0xff]
  %v70 = vld [vmem:[%s1 + $0x110] sm:$0xff]
  %v71 = vld [vmem:[%s1 + $0x118] sm:$0xff]
  %v72 = vld [vmem:[%s1 + $0x120] sm:$0xff]
  %v73 = vld [vmem:[%s1 + $0x128] sm:$0xff]
  %v74 = vld [vmem:[%s1 + $0x130] sm:$0xff]
  %v75 = vld [vmem:[%s1 + $0x138] sm:$0xff]
  %v76 = vld [vmem:[%s1 + $0x140] sm:$0xff]
  %v77 = vld [vmem:[%s1 + $0x148] sm:$0xff]
  %v78 = vld [vmem:[%s1 + $0x150] sm:$0xff]
  %v79 = vld [vmem:[%s1 + $0x158] sm:$0xff]
  %v80 = vld [vmem:[%s1 + $0x160] sm:$0xff]
  %v81 = vld [vmem:[%s1 + $0x168] sm:$0xff]
  %v82 = vld [vmem:[%s1 + $0x170] sm:$0xff]
  %v83 = vld [vmem:[%s1 + $0x178] sm:$0xff]
  %v84 = vld [vmem:[%s1 + $0x180] sm:$0xff]
  %v85 = vld [vmem:[%s1 + $0x188] sm:$0xff]
  %v86 = vld [vmem:[%s1 + $0x190] sm:$0xff]
  %v87 = vld [vmem:[%s1 + $0x198] sm:$0xff]
  %v88 = vld [vmem:[%s1 + $0x1a0] sm:$0xff]
  %v89 = vld [vmem:[%s1 + $0x1a8] sm:$0xff]
  %v90 = vld [vmem:[%s1 + $0x1b0] sm:$0xff]
  %v91 = vld [vmem:[%s1 + $0x1b8] sm:$0xff]
  %v92 = vld [vmem:[%s1 + $0x1c0] sm:$0xff]
  %v93 = vld [vmem:[%s1 + $0x1c8] sm:$0xff]
  %v94 = vld [vmem:[%s1 + $0x1d0] sm:$0xff]
  %v95 = vld [vmem:[%s1 + $0x1d8] sm:$0xff]
  %v96 = vld [vmem:[%s1 + $0x1e0] sm:$0xff]
  %v97 = vld [vmem:[%s1 + $0x1e8] sm:$0xff]
  %v98 = vld [vmem:[%s1 + $0x1f0] sm:$0xff]
  %v99 = vld [vmem:[%s1 + $0x1f8] sm:$0xff]
  %v100 = vld [vmem:[%s1 + $0x200] sm:$0xff]
  %v101 = vld [vmem:[%s1 + $0x208] sm:$0xff]
  %v102 = vld [vmem:[%s1 + $0x210] sm:$0xff]
  %v103 = vld [vmem:[%s1 + $0x218] sm:$0xff]
  %v104 = vld [vmem:[%s1 + $0x220] sm:$0xff]
  %v105 = vld [vmem:[%s1 + $0x228] sm:$0xff]
  %v106 = vld [vmem:[%s1 + $0x230] sm:$0xff]
  %v107 = vld [vmem:[%s1 + $0x238] sm:$0xff]
  %v108 = vld [vmem:[%s1 + $0x240] sm:$0xff]
  %v109 = vld [vmem:[%s1 + $0x248] sm:$0x33]
  %v110 = vld [vmem:[%s2] sm:$0x3]
  %v112 = vlaneseq
  %v113 = vshrl.u32 %v112, 7
  %v114 = vsub.s32 0, %v113
  %v115 = vrot.slane %v110, %v114
  %v116 = vlaneseq
  %v117 = vshrl.u32 %v116, 7
  %v118 = vsub.s32 1, %v117
  %v119 = vrot.slane %v110, %v118
  %v125 = vunpack.c.l.b16 %v33
  %v126 = vunpack.c.h.b16 %v33
  %v127 = vunpack.c.l.b16 %v34
  %v128 = vunpack.c.h.b16 %v34
  %v129 = vunpack.c.l.b16 %v35
  %v130 = vpack.c.b16 %v125, %v125
  %v131 = vpack.c.b16 %v126, %v126
  %v132 = vpack.c.b16 %v127, %v127
  %v133 = vpack.c.b16 %v128, %v128
  %v134 = vpack.c.b16 %v129, %v129
  %v213 = vunpack.c.l.b16 %v36
  %v214 = vunpack.c.h.b16 %v36
  %v215 = vunpack.c.l.b16 %v37
  %v216 = vunpack.c.h.b16 %v37
  %v217 = vunpack.c.l.b16 %v38
  %v218 = vunpack.c.h.b16 %v38
  %v219 = vunpack.c.l.b16 %v39
  %v220 = vunpack.c.h.b16 %v39
  %v221 = vunpack.c.l.b16 %v40
  %v222 = vunpack.c.h.b16 %v40
  %v223 = vunpack.c.l.b16 %v41
  %v224 = vunpack.c.h.b16 %v41
  %v225 = vunpack.c.l.b16 %v42
  %v226 = vunpack.c.h.b16 %v42
  %v227 = vunpack.c.l.b16 %v43
  %v228 = vunpack.c.h.b16 %v43
  %v229 = vunpack.c.l.b16 %v44
  %v230 = vunpack.c.h.b16 %v44
  %v231 = vunpack.c.l.b16 %v45
  %v232 = vunpack.c.h.b16 %v45
  %v233 = vunpack.c.l.b16 %v46
  %v234 = vunpack.c.h.b16 %v46
  %v235 = vunpack.c.l.b16 %v47
  %v236 = vunpack.c.h.b16 %v47
  %v237 = vunpack.c.l.b16 %v48
  %v238 = vunpack.c.h.b16 %v48
  %v239 = vunpack.c.l.b16 %v49
  %v240 = vunpack.c.h.b16 %v49
  %v241 = vunpack.c.l.b16 %v50
  %v242 = vunpack.c.h.b16 %v50
  %v243 = vunpack.c.l.b16 %v51
  %v244 = vunpack.c.h.b16 %v51
  %v245 = vunpack.c.l.b16 %v52
  %v246 = vunpack.c.h.b16 %v52
  %v247 = vunpack.c.l.b16 %v53
  %v248 = vunpack.c.h.b16 %v53
  %v249 = vunpack.c.l.b16 %v54
  %v250 = vunpack.c.h.b16 %v54
  %v251 = vunpack.c.l.b16 %v55
  %v252 = vunpack.c.h.b16 %v55
  %v253 = vunpack.c.l.b16 %v56
  %v254 = vunpack.c.h.b16 %v56
  %v255 = vunpack.c.l.b16 %v57
  %v256 = vunpack.c.h.b16 %v57
  %v257 = vunpack.c.l.b16 %v58
  %v258 = vunpack.c.h.b16 %v58
  %v259 = vunpack.c.l.b16 %v59
  %v260 = vunpack.c.h.b16 %v59
  %v261 = vunpack.c.l.b16 %v60
  %v262 = vunpack.c.h.b16 %v60
  %v263 = vunpack.c.l.b16 %v61
  %v264 = vunpack.c.h.b16 %v61
  %v265 = vunpack.c.l.b16 %v62
  %v266 = vunpack.c.h.b16 %v62
  %v267 = vunpack.c.l.b16 %v63
  %v268 = vunpack.c.h.b16 %v63
  %v269 = vunpack.c.l.b16 %v64
  %v270 = vunpack.c.h.b16 %v64
  %v271 = vunpack.c.l.b16 %v65
  %v272 = vunpack.c.h.b16 %v65
  %v273 = vunpack.c.l.b16 %v66
  %v274 = vunpack.c.h.b16 %v66
  %v275 = vunpack.c.l.b16 %v67
  %v276 = vunpack.c.h.b16 %v67
  %v277 = vunpack.c.l.b16 %v68
  %v278 = vunpack.c.h.b16 %v68
  %v279 = vunpack.c.l.b16 %v69
  %v280 = vunpack.c.h.b16 %v69
  %v281 = vunpack.c.l.b16 %v70
  %v282 = vunpack.c.h.b16 %v70
  %v283 = vunpack.c.l.b16 %v71
  %v284 = vunpack.c.h.b16 %v71
  %v285 = vunpack.c.l.b16 %v72
  %v286 = vunpack.c.h.b16 %v72
  %v287 = vunpack.c.l.b16 %v73
  %v288 = vunpack.c.h.b16 %v73
  %v289 = vunpack.c.l.b16 %v74
  %v290 = vunpack.c.h.b16 %v74
  %v291 = vunpack.c.l.b16 %v75
  %v292 = vunpack.c.h.b16 %v75
  %v293 = vunpack.c.l.b16 %v76
  %v294 = vunpack.c.h.b16 %v76
  %v295 = vunpack.c.l.b16 %v77
  %v296 = vunpack.c.h.b16 %v77
  %v297 = vunpack.c.l.b16 %v78
  %v298 = vunpack.c.h.b16 %v78
  %v299 = vunpack.c.l.b16 %v79
  %v300 = vunpack.c.h.b16 %v79
  %v301 = vunpack.c.l.b16 %v80
  %v302 = vunpack.c.h.b16 %v80
  %v303 = vunpack.c.l.b16 %v81
  %v304 = vunpack.c.h.b16 %v81
  %v305 = vunpack.c.l.b16 %v82
  %v306 = vunpack.c.h.b16 %v82
  %v307 = vunpack.c.l.b16 %v83
  %v308 = vunpack.c.h.b16 %v83
  %v309 = vunpack.c.l.b16 %v84
  %v310 = vunpack.c.h.b16 %v84
  %v311 = vunpack.c.l.b16 %v85
  %v312 = vunpack.c.h.b16 %v85
  %v313 = vunpack.c.l.b16 %v86
  %v314 = vunpack.c.h.b16 %v86
  %v315 = vunpack.c.l.b16 %v87
  %v316 = vunpack.c.h.b16 %v87
  %v317 = vunpack.c.l.b16 %v88
  %v318 = vunpack.c.h.b16 %v88
  %v319 = vunpack.c.l.b16 %v89
  %v320 = vunpack.c.h.b16 %v89
  %v321 = vunpack.c.l.b16 %v90
  %v322 = vunpack.c.h.b16 %v90
  %v323 = vunpack.c.l.b16 %v91
  %v324 = vunpack.c.h.b16 %v91
  %v325 = vunpack.c.l.b16 %v92
  %v326 = vunpack.c.h.b16 %v92
  %v327 = vunpack.c.l.b16 %v93
  %v328 = vunpack.c.h.b16 %v93
  %v329 = vunpack.c.l.b16 %v94
  %v330 = vunpack.c.h.b16 %v94
  %v331 = vunpack.c.l.b16 %v95
  %v332 = vunpack.c.h.b16 %v95
  %v333 = vunpack.c.l.b16 %v96
  %v334 = vunpack.c.h.b16 %v96
  %v335 = vunpack.c.l.b16 %v97
  %v336 = vunpack.c.h.b16 %v97
  %v337 = vunpack.c.l.b16 %v98
  %v338 = vunpack.c.h.b16 %v98
  %v339 = vunpack.c.l.b16 %v99
  %v340 = vunpack.c.h.b16 %v99
  %v341 = vunpack.c.l.b16 %v100
  %v342 = vunpack.c.h.b16 %v100
  %v343 = vunpack.c.l.b16 %v101
  %v344 = vunpack.c.h.b16 %v101
  %v345 = vunpack.c.l.b16 %v102
  %v346 = vunpack.c.h.b16 %v102
  %v347 = vunpack.c.l.b16 %v103
  %v348 = vunpack.c.h.b16 %v103
  %v349 = vunpack.c.l.b16 %v104
  %v350 = vunpack.c.h.b16 %v104
  %v351 = vunpack.c.l.b16 %v105
  %v352 = vunpack.c.h.b16 %v105
  %v353 = vunpack.c.l.b16 %v106
  %v354 = vunpack.c.h.b16 %v106
  %v355 = vunpack.c.l.b16 %v107
  %v356 = vunpack.c.h.b16 %v107
  %v357 = vunpack.c.l.b16 %v108
  %v358 = vunpack.c.h.b16 %v108
  %v359 = vunpack.c.l.b16 %v109
  %v360 = vunpack.c.h.b16 %v109
  %v361 = vpack.c.b16 %v215, %v213
  %v362 = vpack.c.b16 %v216, %v214
  %v363 = vpack.c.b16 %v219, %v217
  %v364 = vpack.c.b16 %v220, %v218
  %v365 = vpack.c.b16 %v223, %v221
  %v366 = vpack.c.b16 %v224, %v222
  %v367 = vpack.c.b16 %v227, %v225
  %v368 = vpack.c.b16 %v228, %v226
  %v369 = vpack.c.b16 %v231, %v229
  %v370 = vpack.c.b16 %v232, %v230
  %v371 = vpack.c.b16 %v235, %v233
  %v372 = vpack.c.b16 %v236, %v234
  %v373 = vpack.c.b16 %v239, %v237
  %v374 = vpack.c.b16 %v240, %v238
  %v375 = vpack.c.b16 %v243, %v241
  %v376 = vpack.c.b16 %v244, %v242
  %v377 = vpack.c.b16 %v247, %v245
  %v378 = vpack.c.b16 %v248, %v246
  %v379 = vpack.c.b16 %v251, %v249
  %v380 = vpack.c.b16 %v252, %v250
  %v381 = vpack.c.b16 %v255, %v253
  %v382 = vpack.c.b16 %v256, %v254
  %v383 = vpack.c.b16 %v259, %v257
  %v384 = vpack.c.b16 %v260, %v258
  %v385 = vpack.c.b16 %v263, %v261
  %v386 = vpack.c.b16 %v264, %v262
  %v387 = vpack.c.b16 %v267, %v265
  %v388 = vpack.c.b16 %v268, %v266
  %v389 = vpack.c.b16 %v271, %v269
  %v390 = vpack.c.b16 %v272, %v270
  %v391 = vpack.c.b16 %v275, %v273
  %v392 = vpack.c.b16 %v276, %v274
  %v393 = vpack.c.b16 %v279, %v277
  %v394 = vpack.c.b16 %v280, %v278
  %v395 = vpack.c.b16 %v283, %v281
  %v396 = vpack.c.b16 %v284, %v282
  %v397 = vpack.c.b16 %v287, %v285
  %v398 = vpack.c.b16 %v288, %v286
  %v399 = vpack.c.b16 %v291, %v289
  %v400 = vpack.c.b16 %v292, %v290
  %v401 = vpack.c.b16 %v295, %v293
  %v402 = vpack.c.b16 %v296, %v294
  %v403 = vpack.c.b16 %v299, %v297
  %v404 = vpack.c.b16 %v300, %v298
  %v405 = vpack.c.b16 %v303, %v301
  %v406 = vpack.c.b16 %v304, %v302
  %v407 = vpack.c.b16 %v307, %v305
  %v408 = vpack.c.b16 %v308, %v306
  %v409 = vpack.c.b16 %v311, %v309
  %v410 = vpack.c.b16 %v312, %v310
  %v411 = vpack.c.b16 %v315, %v313
  %v412 = vpack.c.b16 %v316, %v314
  %v413 = vpack.c.b16 %v319, %v317
  %v414 = vpack.c.b16 %v320, %v318
  %v415 = vpack.c.b16 %v323, %v321
  %v416 = vpack.c.b16 %v324, %v322
  %v417 = vpack.c.b16 %v327, %v325
  %v418 = vpack.c.b16 %v328, %v326
  %v419 = vpack.c.b16 %v331, %v329
  %v420 = vpack.c.b16 %v332, %v330
  %v421 = vpack.c.b16 %v335, %v333
  %v422 = vpack.c.b16 %v336, %v334
  %v423 = vpack.c.b16 %v339, %v337
  %v424 = vpack.c.b16 %v340, %v338
  %v425 = vpack.c.b16 %v343, %v341
  %v426 = vpack.c.b16 %v344, %v342
  %v427 = vpack.c.b16 %v347, %v345
  %v428 = vpack.c.b16 %v348, %v346
  %v429 = vpack.c.b16 %v351, %v349
  %v430 = vpack.c.b16 %v352, %v350
  %v431 = vpack.c.b16 %v355, %v353
  %v432 = vpack.c.b16 %v356, %v354
  %v433 = vpack.c.b16 %v359, %v357
  %v434 = vpack.c.b16 %v360, %v358
  %vm507 = vcmask 621568
  %v509 = vsel %vm507, %v134, 0
  %vm511 = vcmask 1045504
  %v513 = vsel %vm511, %v433, 0
  %v516 = vsel %vm511, %v434, 0
  %518 = vmatprep.subr.bf16.mxu0 %v362
  %519 = vmatpush1.bf16.msra.mxu0 %v361
  %520 = vmatprep.subr.bf16.mxu0 %v364
  %521 = vmatpush1.bf16.msra.mxu0 %v363
  %522 = vmatprep.subr.bf16.mxu0 %v366
  %523 = vmatpush1.bf16.msra.mxu0 %v365
  %524 = vmatprep.subr.bf16.mxu0 %v368
  %525 = vmatpush1.bf16.msra.mxu0 %v367
  %526 = vmatprep.subr.bf16.mxu0 %v370
  %527 = vmatpush1.bf16.msra.mxu0 %v369
  %528 = vmatprep.subr.bf16.mxu0 %v372
  %529 = vmatpush1.bf16.msra.mxu0 %v371
  %530 = vmatprep.subr.bf16.mxu0 %v374
  %531 = vmatpush1.bf16.msra.mxu0 %v373
  %532 = vmatprep.subr.bf16.mxu0 %v376
  %533 = vmatpush1.bf16.msra.mxu0 %v375
  %534 = vmatprep.subr.bf16.mxu0 %v378
  %535 = vmatpush1.bf16.msra.mxu0 %v377
  %536 = vmatprep.subr.bf16.mxu0 %v380
  %537 = vmatpush1.bf16.msra.mxu0 %v379
  %538 = vmatprep.subr.bf16.mxu0 %v382
  %539 = vmatpush1.bf16.msra.mxu0 %v381
  %540 = vmatprep.subr.bf16.mxu0 %v384
  %541 = vmatpush1.bf16.msra.mxu0 %v383
  %542 = vmatprep.subr.bf16.mxu0 %v386
  %543 = vmatpush1.bf16.msra.mxu0 %v385
  %544 = vmatprep.subr.bf16.mxu0 %v388
  %545 = vmatpush1.bf16.msra.mxu0 %v387
  %546 = vmatprep.subr.bf16.mxu0 %v390
  %547 = vmatpush1.bf16.msra.mxu0 %v389
  %548 = vmatprep.subr.bf16.mxu0 %v392
  %549 = vmatpush1.bf16.msra.mxu0 %v391
  %550 = vmatprep.mubr.bf16.mxu0 %v131
  %551 = vmatmul.mubr.bf16.gmra.mrb[0].mxu0 %v130
  %v552 = vpop.f32.mrb[0].mxu0
  %v553 = vadd.f32 %v115, %v552
  %v554 = vpop.f32.mrb[0].mxu0
  %v555 = vadd.f32 %v119, %v554
  %v556 = vpop.f32.mrb[0].mxu0
  %v557 = vpop.f32.mrb[0].mxu0
  %558 = vdwg.mxu0
  %559 = vmatprep.subr.bf16.mxu0 %v394
  %560 = vmatpush1.bf16.msra.mxu0 %v393
  %561 = vmatprep.subr.bf16.mxu0 %v396
  %562 = vmatpush1.bf16.msra.mxu0 %v395
  %563 = vmatprep.subr.bf16.mxu0 %v398
  %564 = vmatpush1.bf16.msra.mxu0 %v397
  %565 = vmatprep.subr.bf16.mxu0 %v400
  %566 = vmatpush1.bf16.msra.mxu0 %v399
  %567 = vmatprep.subr.bf16.mxu0 %v402
  %568 = vmatpush1.bf16.msra.mxu0 %v401
  %569 = vmatprep.subr.bf16.mxu0 %v404
  %570 = vmatpush1.bf16.msra.mxu0 %v403
  %571 = vmatprep.subr.bf16.mxu0 %v406
  %572 = vmatpush1.bf16.msra.mxu0 %v405
  %573 = vmatprep.subr.bf16.mxu0 %v408
  %574 = vmatpush1.bf16.msra.mxu0 %v407
  %575 = vmatprep.subr.bf16.mxu0 %v410
  %576 = vmatpush1.bf16.msra.mxu0 %v409
  %577 = vmatprep.subr.bf16.mxu0 %v412
  %578 = vmatpush1.bf16.msra.mxu0 %v411
  %579 = vmatprep.subr.bf16.mxu0 %v414
  %580 = vmatpush1.bf16.msra.mxu0 %v413
  %581 = vmatprep.subr.bf16.mxu0 %v416
  %582 = vmatpush1.bf16.msra.mxu0 %v415
  %583 = vmatprep.subr.bf16.mxu0 %v418
  %584 = vmatpush1.bf16.msra.mxu0 %v417
  %585 = vmatprep.subr.bf16.mxu0 %v420
  %586 = vmatpush1.bf16.msra.mxu0 %v419
  %587 = vmatprep.subr.bf16.mxu0 %v422
  %588 = vmatpush1.bf16.msra.mxu0 %v421
  %589 = vmatprep.subr.bf16.mxu0 %v424
  %590 = vmatpush1.bf16.msra.mxu0 %v423
  %591 = vmatprep.mubr.bf16.mxu0 %v133
  %592 = vmatmul.mubr.bf16.gmra.mrb[0].mxu0 %v132
  %v593 = vpop.f32.mrb[0].mxu0
  %v594 = vadd.f32 %v553, %v593
  %v595 = vpop.f32.mrb[0].mxu0
  %v596 = vadd.f32 %v555, %v595
  %v597 = vpop.f32.mrb[0].mxu0
  %v598 = vpop.f32.mrb[0].mxu0
  %599 = vdwg.mxu0
  %600 = vmatprep.subr.bf16.mxu0 %v426
  %601 = vmatpush1.bf16.msra.mxu0 %v425
  %602 = vmatprep.subr.bf16.mxu0 %v428
  %603 = vmatpush1.bf16.msra.mxu0 %v427
  %604 = vmatprep.subr.bf16.mxu0 %v430
  %605 = vmatpush1.bf16.msra.mxu0 %v429
  %606 = vmatprep.subr.bf16.mxu0 %v432
  %607 = vmatpush1.bf16.msra.mxu0 %v431
  %608 = vmatprep.subr.bf16.mxu0 %v516
  %609 = vmatpush1.bf16.msra.mxu0 %v513
  %610 = vmatprep.subr.bf16.mxu0 0
  %611 = vmatpush1.bf16.msra.mxu0 0
  %612 = vmatprep.subr.bf16.mxu0 0
  %613 = vmatpush1.bf16.msra.mxu0 0
  %614 = vmatprep.subr.bf16.mxu0 0
  %615 = vmatpush1.bf16.msra.mxu0 0
  %616 = vmatprep.subr.bf16.mxu0 0
  %617 = vmatpush1.bf16.msra.mxu0 0
  %618 = vmatprep.subr.bf16.mxu0 0
  %619 = vmatpush1.bf16.msra.mxu0 0
  %620 = vmatprep.subr.bf16.mxu0 0
  %621 = vmatpush1.bf16.msra.mxu0 0
  %622 = vmatprep.subr.bf16.mxu0 0
  %623 = vmatpush1.bf16.msra.mxu0 0
  %624 = vmatprep.subr.bf16.mxu0 0
  %625 = vmatpush1.bf16.msra.mxu0 0
  %626 = vmatprep.subr.bf16.mxu0 0
  %627 = vmatpush1.bf16.msra.mxu0 0
  %628 = vmatprep.subr.bf16.mxu0 0
  %629 = vmatpush1.bf16.msra.mxu0 0
  %630 = vmatprep.subr.bf16.mxu0 0
  %631 = vmatpush1.bf16.msra.mxu0 0
  %632 = vmatprep.mubr.bf16.mxu0 0
  %633 = vmatmul.mubr.bf16.gmra.mrb[0].mxu0 %v509
  %v634 = vpop.f32.mrb[0].mxu0
  %v635 = vadd.f32 %v594, %v634
  %v636 = vpop.f32.mrb[0].mxu0
  %v637 = vadd.f32 %v596, %v636
  %v638 = vpop.f32.mrb[0].mxu0
  %v639 = vpop.f32.mrb[0].mxu0
  %640 = vdwg.mxu0
  %v641 = vmax.f32 %v635, 0.0
  %v642 = vmax.f32 %v637, 0.0
  %v643 = vrot.slane %v641, 6
  %v644 = vrot.slane %v642, 6
  %v645 = vmax.f32 %v641, %v643
  %v646 = vmax.f32 %v642, %v644
  %v647 = vrot.slane %v641, 4
  %v648 = vrot.slane %v642, 4
  %v649 = vrot.slane %v641, 2
  %v650 = vrot.slane %v642, 2
  %v651 = vmax.f32 %v647, %v649
  %v652 = vmax.f32 %v648, %v650
  %v653 = vmax.f32 %v645, %v651
  %v654 = vmax.f32 %v646, %v652
  %v655 = vld [vmem:[%s3] sm:$0xff]
  %v656 = vld [vmem:[%s3 + $0x8] sm:$0xff]
  %v657 = vld [vmem:[%s3 + $0x10] sm:$0xff]
  %v658 = vld [vmem:[%s3 + $0x18] sm:$0xff]
  %v659 = vld [vmem:[%s3 + $0x20] sm:$0xff]
  %v660 = vld [vmem:[%s3 + $0x28] sm:$0xff]
  %v661 = vld [vmem:[%s3 + $0x30] sm:$0xff]
  %v662 = vld [vmem:[%s3 + $0x38] sm:$0xff]
  %v663 = vld [vmem:[%s3 + $0x40] sm:$0xff]
  %v664 = vld [vmem:[%s3 + $0x48] sm:$0xff]
  %v665 = vld [vmem:[%s3 + $0x50] sm:$0xff]
  %v666 = vld [vmem:[%s3 + $0x58] sm:$0xff]
  %v667 = vld [vmem:[%s3 + $0x60] sm:$0xff]
  %v668 = vld [vmem:[%s3 + $0x68] sm:$0xff]
  %v669 = vld [vmem:[%s3 + $0x70] sm:$0xff]
  %v670 = vld [vmem:[%s3 + $0x78] sm:$0xff]
  %v671 = vld [vmem:[%s3 + $0x80] sm:$0xff]
  %v672 = vld [vmem:[%s3 + $0x88] sm:$0xff]
  %v673 = vld [vmem:[%s3 + $0x90] sm:$0xff]
  %v674 = vld [vmem:[%s3 + $0x98] sm:$0xff]
  %v675 = vld [vmem:[%s3 + $0xa0] sm:$0xff]
  %v676 = vld [vmem:[%s3 + $0xa8] sm:$0xff]
  %v677 = vld [vmem:[%s3 + $0xb0] sm:$0xff]
  %v678 = vld [vmem:[%s3 + $0xb8] sm:$0xff]
  %v679 = vld [vmem:[%s3 + $0xc0] sm:$0xff]
  %v680 = vld [vmem:[%s3 + $0xc8] sm:$0xff]
  %v681 = vld [vmem:[%s3 + $0xd0] sm:$0xff]
  %v682 = vld [vmem:[%s3 + $0xd8] sm:$0xff]
  %v683 = vld [vmem:[%s3 + $0xe0] sm:$0xff]
  %v684 = vld [vmem:[%s3 + $0xe8] sm:$0xff]
  %v685 = vld [vmem:[%s3 + $0xf0] sm:$0xff]
  %v686 = vld [vmem:[%s3 + $0xf8] sm:$0xff]
  %v687 = vld [vmem:[%s4] sm:$0x1]
  %v689 = vlaneseq
  %v690 = vshrl.u32 %v689, 7
  %v691 = vsub.s32 0, %v690
  %v692 = vrot.slane %v687, %v691
  %694 = vmatprep.subr.mxu0 0.0
  %695 = vmatpush1.msra.mxu0 %v655
  %696 = vmatprep.subr.mxu0 0.0
  %697 = vmatpush1.msra.mxu0 %v656
  %698 = vmatprep.subr.mxu0 0.0
  %699 = vmatpush1.msra.mxu0 %v657
  %700 = vmatprep.subr.mxu0 0.0
  %701 = vmatpush1.msra.mxu0 %v658
  %702 = vmatprep.subr.mxu0 0.0
  %703 = vmatpush1.msra.mxu0 %v659
  %704 = vmatprep.subr.mxu0 0.0
  %705 = vmatpush1.msra.mxu0 %v660
  %706 = vmatprep.subr.mxu0 0.0
  %707 = vmatpush1.msra.mxu0 %v661
  %708 = vmatprep.subr.mxu0 0.0
  %709 = vmatpush1.msra.mxu0 %v662
  %710 = vmatprep.subr.mxu0 0.0
  %711 = vmatpush1.msra.mxu0 %v663
  %712 = vmatprep.subr.mxu0 0.0
  %713 = vmatpush1.msra.mxu0 %v664
  %714 = vmatprep.subr.mxu0 0.0
  %715 = vmatpush1.msra.mxu0 %v665
  %716 = vmatprep.subr.mxu0 0.0
  %717 = vmatpush1.msra.mxu0 %v666
  %718 = vmatprep.subr.mxu0 0.0
  %719 = vmatpush1.msra.mxu0 %v667
  %720 = vmatprep.subr.mxu0 0.0
  %721 = vmatpush1.msra.mxu0 %v668
  %722 = vmatprep.subr.mxu0 0.0
  %723 = vmatpush1.msra.mxu0 %v669
  %724 = vmatprep.subr.mxu0 0.0
  %725 = vmatpush1.msra.mxu0 %v670
  %726 = vmatprep.subr.mxu0 0.0
  %727 = vmatpush1.msra.mxu0 %v671
  %728 = vmatprep.subr.mxu0 0.0
  %729 = vmatpush1.msra.mxu0 %v672
  %730 = vmatprep.subr.mxu0 0.0
  %731 = vmatpush1.msra.mxu0 %v673
  %732 = vmatprep.subr.mxu0 0.0
  %733 = vmatpush1.msra.mxu0 %v674
  %734 = vmatprep.subr.mxu0 0.0
  %735 = vmatpush1.msra.mxu0 %v675
  %736 = vmatprep.subr.mxu0 0.0
  %737 = vmatpush1.msra.mxu0 %v676
  %738 = vmatprep.subr.mxu0 0.0
  %739 = vmatpush1.msra.mxu0 %v677
  %740 = vmatprep.subr.mxu0 0.0
  %741 = vmatpush1.msra.mxu0 %v678
  %742 = vmatprep.subr.mxu0 0.0
  %743 = vmatpush1.msra.mxu0 %v679
  %744 = vmatprep.subr.mxu0 0.0
  %745 = vmatpush1.msra.mxu0 %v680
  %746 = vmatprep.subr.mxu0 0.0
  %747 = vmatpush1.msra.mxu0 %v681
  %748 = vmatprep.subr.mxu0 0.0
  %749 = vmatpush1.msra.mxu0 %v682
  %750 = vmatprep.subr.mxu0 0.0
  %751 = vmatpush1.msra.mxu0 %v683
  %752 = vmatprep.subr.mxu0 0.0
  %753 = vmatpush1.msra.mxu0 %v684
  %754 = vmatprep.subr.mxu0 0.0
  %755 = vmatpush1.msra.mxu0 %v685
  %756 = vmatprep.subr.mxu0 0.0
  %757 = vmatpush1.msra.mxu0 %v686
  %758 = vmatprep.mubr.f32.mxu0 %v654
  %759 = vmatmul.mubr.f32.gmra.mrb[0].mxu0 %v653
  %v760 = vpop.f32.mrb[0].mxu0
  %v761 = vadd.f32 %v692, %v760
  %v762 = vpop.f32.mrb[0].mxu0
  %763 = vdwg.mxu0
  %v764 = vmax.f32 %v761, 0.0
  %v765 = vld [vmem:[%s5] sm:$0xff]
  %v766 = vld [vmem:[%s5 + $0x8] sm:$0xff]
  %v767 = vld [vmem:[%s5 + $0x10] sm:$0xff]
  %v768 = vld [vmem:[%s5 + $0x18] sm:$0xff]
  %v769 = vld [vmem:[%s5 + $0x20] sm:$0xff]
  %v770 = vld [vmem:[%s5 + $0x28] sm:$0xff]
  %v771 = vld [vmem:[%s5 + $0x30] sm:$0xff]
  %v772 = vld [vmem:[%s5 + $0x38] sm:$0xff]
  %v773 = vld [vmem:[%s5 + $0x40] sm:$0xff]
  %v774 = vld [vmem:[%s5 + $0x48] sm:$0xff]
  %v775 = vld [vmem:[%s5 + $0x50] sm:$0xff]
  %v776 = vld [vmem:[%s5 + $0x58] sm:$0xff]
  %v777 = vld [vmem:[%s5 + $0x60] sm:$0xff]
  %v778 = vld [vmem:[%s5 + $0x68] sm:$0xff]
  %v779 = vld [vmem:[%s5 + $0x70] sm:$0xff]
  %v780 = vld [vmem:[%s5 + $0x78] sm:$0xff]
  %v781 = vld [vmem:[%s6] sm:$0x1]
  %v783 = vlaneseq
  %v784 = vshrl.u32 %v783, 7
  %v785 = vsub.s32 0, %v784
  %v786 = vrot.slane %v781, %v785
  %788 = vmatprep.subr.mxu0 0.0
  %789 = vmatpush1.msra.mxu0 %v765
  %790 = vmatprep.subr.mxu0 0.0
  %791 = vmatpush1.msra.mxu0 %v766
  %792 = vmatprep.subr.mxu0 0.0
  %793 = vmatpush1.msra.mxu0 %v767
  %794 = vmatprep.subr.mxu0 0.0
  %795 = vmatpush1.msra.mxu0 %v768
  %796 = vmatprep.subr.mxu0 0.0
  %797 = vmatpush1.msra.mxu0 %v769
  %798 = vmatprep.subr.mxu0 0.0
  %799 = vmatpush1.msra.mxu0 %v770
  %800 = vmatprep.subr.mxu0 0.0
  %801 = vmatpush1.msra.mxu0 %v771
  %802 = vmatprep.subr.mxu0 0.0
  %803 = vmatpush1.msra.mxu0 %v772
  %804 = vmatprep.subr.mxu0 0.0
  %805 = vmatpush1.msra.mxu0 %v773
  %806 = vmatprep.subr.mxu0 0.0
  %807 = vmatpush1.msra.mxu0 %v774
  %808 = vmatprep.subr.mxu0 0.0
  %809 = vmatpush1.msra.mxu0 %v775
  %810 = vmatprep.subr.mxu0 0.0
  %811 = vmatpush1.msra.mxu0 %v776
  %812 = vmatprep.subr.mxu0 0.0
  %813 = vmatpush1.msra.mxu0 %v777
  %814 = vmatprep.subr.mxu0 0.0
  %815 = vmatpush1.msra.mxu0 %v778
  %816 = vmatprep.subr.mxu0 0.0
  %817 = vmatpush1.msra.mxu0 %v779
  %818 = vmatprep.subr.mxu0 0.0
  %819 = vmatpush1.msra.mxu0 %v780
  %820 = vmatprep.subr.mxu0 0.0
  %821 = vmatpush1.msra.mxu0 0.0
  %822 = vmatprep.subr.mxu0 0.0
  %823 = vmatpush1.msra.mxu0 0.0
  %824 = vmatprep.subr.mxu0 0.0
  %825 = vmatpush1.msra.mxu0 0.0
  %826 = vmatprep.subr.mxu0 0.0
  %827 = vmatpush1.msra.mxu0 0.0
  %828 = vmatprep.subr.mxu0 0.0
  %829 = vmatpush1.msra.mxu0 0.0
  %830 = vmatprep.subr.mxu0 0.0
  %831 = vmatpush1.msra.mxu0 0.0
  %832 = vmatprep.subr.mxu0 0.0
  %833 = vmatpush1.msra.mxu0 0.0
  %834 = vmatprep.subr.mxu0 0.0
  %835 = vmatpush1.msra.mxu0 0.0
  %836 = vmatprep.subr.mxu0 0.0
  %837 = vmatpush1.msra.mxu0 0.0
  %838 = vmatprep.subr.mxu0 0.0
  %839 = vmatpush1.msra.mxu0 0.0
  %840 = vmatprep.subr.mxu0 0.0
  %841 = vmatpush1.msra.mxu0 0.0
  %842 = vmatprep.subr.mxu0 0.0
  %843 = vmatpush1.msra.mxu0 0.0
  %844 = vmatprep.subr.mxu0 0.0
  %845 = vmatpush1.msra.mxu0 0.0
  %846 = vmatprep.subr.mxu0 0.0
  %847 = vmatpush1.msra.mxu0 0.0
  %848 = vmatprep.subr.mxu0 0.0
  %849 = vmatpush1.msra.mxu0 0.0
  %850 = vmatprep.subr.mxu0 0.0
  %851 = vmatpush1.msra.mxu0 0.0
  %852 = vmatprep.mubr.f32.mxu0 0.0
  %853 = vmatmul.mubr.f32.gmra.mrb[0].mxu0 %v764
  %v854 = vpop.f32.mrb[0].mxu0
  %v855 = vadd.f32 %v786, %v854
  %v856 = vpop.f32.mrb[0].mxu0
  %857 = vdwg.mxu0
  %v858 = vmax.f32 %v855, 0.0
  %v859 = vld [vmem:[%s7] sm:$0xff]
  %v860 = vld [vmem:[%s7 + $0x8] sm:$0xff]
  %v861 = vld [vmem:[%s7 + $0x10] sm:$0xff]
  %v862 = vld [vmem:[%s7 + $0x18] sm:$0xff]
  %v863 = vld [vmem:[%s7 + $0x20] sm:$0xff]
  %v864 = vld [vmem:[%s7 + $0x28] sm:$0xff]
  %v865 = vld [vmem:[%s7 + $0x30] sm:$0xff]
  %v866 = vld [vmem:[%s7 + $0x38] sm:$0xff]
  %v867 = vld [vmem:[%s7 + $0x40] sm:$0xff]
  %v868 = vld [vmem:[%s7 + $0x48] sm:$0xff]
  %v869 = vld [vmem:[%s7 + $0x50] sm:$0xff]
  %v870 = vld [vmem:[%s7 + $0x58] sm:$0xff]
  %v871 = vld [vmem:[%s7 + $0x60] sm:$0xff]
  %v872 = vld [vmem:[%s7 + $0x68] sm:$0xff]
  %v873 = vld [vmem:[%s7 + $0x70] sm:$0xff]
  %v874 = vld [vmem:[%s7 + $0x78] sm:$0xff]
  %v875 = vld [vmem:[%s8] sm:$0x1]
  %v877 = vlaneseq
  %v878 = vshrl.u32 %v877, 7
  %v879 = vsub.s32 0, %v878
  %v880 = vrot.slane %v875, %v879
  %882 = vmatprep.subr.mxu0 0.0
  %883 = vmatpush1.msra.mxu0 %v859
  %884 = vmatprep.subr.mxu0 0.0
  %885 = vmatpush1.msra.mxu0 %v860
  %886 = vmatprep.subr.mxu0 0.0
  %887 = vmatpush1.msra.mxu0 %v861
  %888 = vmatprep.subr.mxu0 0.0
  %889 = vmatpush1.msra.mxu0 %v862
  %890 = vmatprep.subr.mxu0 0.0
  %891 = vmatpush1.msra.mxu0 %v863
  %892 = vmatprep.subr.mxu0 0.0
  %893 = vmatpush1.msra.mxu0 %v864
  %894 = vmatprep.subr.mxu0 0.0
  %895 = vmatpush1.msra.mxu0 %v865
  %896 = vmatprep.subr.mxu0 0.0
  %897 = vmatpush1.msra.mxu0 %v866
  %898 = vmatprep.subr.mxu0 0.0
  %899 = vmatpush1.msra.mxu0 %v867
  %900 = vmatprep.subr.mxu0 0.0
  %901 = vmatpush1.msra.mxu0 %v868
  %902 = vmatprep.subr.mxu0 0.0
  %903 = vmatpush1.msra.mxu0 %v869
  %904 = vmatprep.subr.mxu0 0.0
  %905 = vmatpush1.msra.mxu0 %v870
  %906 = vmatprep.subr.mxu0 0.0
  %907 = vmatpush1.msra.mxu0 %v871
  %908 = vmatprep.subr.mxu0 0.0
  %909 = vmatpush1.msra.mxu0 %v872
  %910 = vmatprep.subr.mxu0 0.0
  %911 = vmatpush1.msra.mxu0 %v873
  %912 = vmatprep.subr.mxu0 0.0
  %913 = vmatpush1.msra.mxu0 %v874
  %914 = vmatprep.subr.mxu0 0.0
  %915 = vmatpush1.msra.mxu0 0.0
  %916 = vmatprep.subr.mxu0 0.0
  %917 = vmatpush1.msra.mxu0 0.0
  %918 = vmatprep.subr.mxu0 0.0
  %919 = vmatpush1.msra.mxu0 0.0
  %920 = vmatprep.subr.mxu0 0.0
  %921 = vmatpush1.msra.mxu0 0.0
  %922 = vmatprep.subr.mxu0 0.0
  %923 = vmatpush1.msra.mxu0 0.0
  %924 = vmatprep.subr.mxu0 0.0
  %925 = vmatpush1.msra.mxu0 0.0
  %926 = vmatprep.subr.mxu0 0.0
  %927 = vmatpush1.msra.mxu0 0.0
  %928 = vmatprep.subr.mxu0 0.0
  %929 = vmatpush1.msra.mxu0 0.0
  %930 = vmatprep.subr.mxu0 0.0
  %931 = vmatpush1.msra.mxu0 0.0
  %932 = vmatprep.subr.mxu0 0.0
  %933 = vmatpush1.msra.mxu0 0.0
  %934 = vmatprep.subr.mxu0 0.0
  %935 = vmatpush1.msra.mxu0 0.0
  %936 = vmatprep.subr.mxu0 0.0
  %937 = vmatpush1.msra.mxu0 0.0
  %938 = vmatprep.subr.mxu0 0.0
  %939 = vmatpush1.msra.mxu0 0.0
  %940 = vmatprep.subr.mxu0 0.0
  %941 = vmatpush1.msra.mxu0 0.0
  %942 = vmatprep.subr.mxu0 0.0
  %943 = vmatpush1.msra.mxu0 0.0
  %944 = vmatprep.subr.mxu0 0.0
  %945 = vmatpush1.msra.mxu0 0.0
  %946 = vmatprep.mubr.f32.mxu0 0.0
  %947 = vmatmul.mubr.f32.gmra.mrb[0].mxu0 %v858
  %v948 = vpop.f32.mrb[0].mxu0
  %v949 = vadd.f32 %v880, %v948
  %v950 = vpop.f32.mrb[0].mxu0
  %951 = vdwg.mxu0
  %952 = vst [vmem:[%s9] sm:$0xff] %v949
  // Predicated region
  $region38: #{simple_cnn_forward.1} parent=0 // pred_check
    _
  $region39: #{simple_cnn_forward.1} parent=0 // pred_check_branch
    %954 = sbr.rel (0) target = $region41
  $region40: #{simple_cnn_forward.1} parent=0 // pred_region
    _
  $region41: #{simple_cnn_forward.1} parent=0 // pred_fallthru
    _
  // Predicated region
  $region42: #{simple_cnn_forward.1} parent=0 // pred_check
    _
  $region43: #{simple_cnn_forward.1} parent=0 // pred_check_branch
    %956 = sbr.rel (0) target = $region45
  $region44: #{simple_cnn_forward.1} parent=0 // pred_region
    _
  $region45: #{simple_cnn_forward.1} parent=0 // pred_fallthru
    _

</llo_original>
